<compile_context>
chip_gen: v7x
topology: tpu7x:2x2x1
jax: 0.10.0
libtpu: 0.0.40
codegen_flags: <defaults>
</compile_context>

<pallas_src>
import jax
import jax.numpy as jnp
from jax.experimental import pallas as pl
from jax.experimental.pallas import tpu as pltpu


# ---------------------------------------------------------------------------
# Pallas kernel: one tile of  out = A_hat @ feat  with f32 accumulation.
# ---------------------------------------------------------------------------
def _spmm_kernel(a_ref, x_ref, o_ref, acc_ref):
    kk = pl.program_id(2)

    @pl.when(kk == 0)
    def _():
        acc_ref[...] = jnp.zeros_like(acc_ref)

    # A_hat tile is bf16 in HBM/VMEM; cast up so the accumulation matches the
    # f32 reference exactly (HBM traffic on A is already halved by bf16 storage).
    acc_ref[...] += jnp.dot(
        a_ref[...].astype(jnp.float32),
        x_ref[...],
        preferred_element_type=jnp.float32,
    )

    @pl.when(kk == pl.num_programs(2) - 1)
    def _():
        o_ref[...] = acc_ref[...].astype(o_ref.dtype)


def _round_up(x, m):
    return (x + m - 1) // m * m


def _choose_tile(padded_dim, cap):
    """Largest multiple of 128 that divides `padded_dim` and is <= cap."""
    best = 128
    t = 128
    while t <= cap:
        if padded_dim % t == 0:
            best = t
        t += 128
    return best


# ---------------------------------------------------------------------------
# One propagation step:  feat <- A_hat @ feat   (tiled matmul pallas_call)
# ---------------------------------------------------------------------------
def lgconv_step(a_hat, feat, *, tm, tk, tf):
    n_p, f_p = feat.shape
    grid = (n_p // tm, f_p // tf, n_p // tk)
    return pl.pallas_call(
        _spmm_kernel,
        out_shape=jax.ShapeDtypeStruct((n_p, f_p), jnp.float32),
        grid_spec=pltpu.PrefetchScalarGridSpec(
            num_scalar_prefetch=0,
            grid=grid,
            in_specs=[
                pl.BlockSpec((tm, tk), lambda i, j, kk: (i, kk)),   # A_hat tile
                pl.BlockSpec((tk, tf), lambda i, j, kk: (kk, j)),   # feat tile
            ],
            out_specs=pl.BlockSpec((tm, tf), lambda i, j, kk: (i, j)),
            scratch_shapes=[pltpu.VMEM((tm, tf), jnp.float32)],
        ),
        compiler_params=pltpu.CompilerParams(
            dimension_semantics=("parallel", "parallel", "arbitrary"),
        ),
    )(a_hat, feat)


# ---------------------------------------------------------------------------
# Full LGConv forward: norm folding, padding, k propagation steps.
# ---------------------------------------------------------------------------
def lgconv_forward(adj, feat, k=1, *, adj_dtype=jnp.bfloat16):
    n, f = feat.shape

    # in-degree of node i = row sum of A (A[i, j] = 1 iff edge j -> i)
    degs = jnp.maximum(jnp.sum(adj.astype(jnp.float32), axis=1), 1.0)
    norm = jax.lax.rsqrt(degs)  # degs ** -0.5, computed in f32

    # Fold symmetric normalization into the adjacency once (f32 math),
    # then quantize the dominant memory operand to bf16 for HBM traffic.
    a_hat = (norm[:, None] * adj.astype(jnp.float32) * norm[None, :]).astype(adj_dtype)

    # Pad to lane/tile-friendly shapes (zero padding keeps semantics exact).
    n_p = _round_up(n, 128)
    f_p = _round_up(f, 128)
    tm = tk = _choose_tile(n_p, 512)
    tf = _choose_tile(f_p, 256)

    a_hat = jnp.pad(a_hat, ((0, n_p - n), (0, n_p - n)))
    x = jnp.pad(feat.astype(jnp.float32), ((0, n_p - n), (0, f_p - f)))

    for _ in range(k):
        x = lgconv_step(a_hat, x, tm=tm, tk=tk, tf=tf)

    # TODO(synk): optional self.norm post-module is None by default; not implemented.
    return x[:n, :f].astype(feat.dtype)


if __name__ == "__main__":
    key = jax.random.PRNGKey(0)
    k_adj, k_feat = jax.random.split(key)

    N = 16   # nodes
    F = 32   # feature dim
    K = 2    # propagation steps

    # deterministic synthetic graph: dense 0/1 adjacency (edge j->i stored at A[i,j])
    adj = jax.random.bernoulli(k_adj, p=0.3, shape=(N, N)).astype(jnp.float32)
    feat = jax.random.normal(k_feat, (N, F), dtype=jnp.float32)

    out = jax.block_until_ready(lgconv_forward(adj, feat, k=K))
    assert out.shape == (N, F)

    # --- Reference 1: same bf16-quantized folded adjacency (tight check) -----
    degs = jnp.maximum(jnp.sum(adj, axis=1), 1.0)
    norm = jax.lax.rsqrt(degs)
    a_hat_q = (norm[:, None] * adj * norm[None, :]).astype(jnp.bfloat16).astype(jnp.float32)
    ref_q = feat
    for _ in range(K):
        ref_q = jnp.dot(a_hat_q, ref_q, precision=jax.lax.Precision.HIGHEST)
    assert jnp.allclose(out, ref_q, atol=1e-4, rtol=1e-4), "mismatch vs quantized reference"

    # --- Reference 2: original unfolded f32 formulation (semantic check) -----
    ref = feat
    nrm = norm.reshape(-1, 1)
    for _ in range(K):
        ref = ref * nrm
        ref = jnp.dot(adj, ref, precision=jax.lax.Precision.HIGHEST)
        ref = ref * nrm
    assert jnp.allclose(out, ref, atol=2e-2, rtol=2e-2), "mismatch vs f32 semantic reference"

    print("KERNEL_OK")
</pallas_src>

<mosaic_0001>
module attributes {stable_mosaic.version = 11 : i64} {
  func.func @_spmm_kernel(%arg0: i32, %arg1: i32, %arg2: i32, %arg3: memref<128x128xbf16, #tpu.memory_space<vmem>>, %arg4: memref<128x128xf32, #tpu.memory_space<vmem>>, %arg5: memref<128x128xf32, #tpu.memory_space<vmem>>, %arg6: memref<128x128xf32, #tpu.memory_space<vmem>>) attributes {dimension_semantics = [#tpu.dimension_semantics<parallel>, #tpu.dimension_semantics<parallel>, #tpu.dimension_semantics<arbitrary>], iteration_bounds = array<i64: 1, 1, 1>, scalar_prefetch = 0 : i64, scratch_operands = 1 : i64, tpu.core_type = #tpu.core_type<tc>, window_params = [{transform_indices = @transform_0, window_bounds = array<i64: 128, 128>}, {transform_indices = @transform_1, window_bounds = array<i64: 128, 128>}, {transform_indices = @transform_2, window_bounds = array<i64: 128, 128>}]} {
    %c0_i32 = arith.constant 0 : i32
    %0 = arith.cmpi eq, %arg2, %c0_i32 : i32
    %1 = arith.extui %0 : i1 to i32
    %c0_i32_0 = arith.constant 0 : i32
    %2 = arith.cmpi ne, %1, %c0_i32_0 : i32
    scf.if %2 {
      %cst_10 = arith.constant 0.000000e+00 : f32
      %13 = vector.broadcast %cst_10 : f32 to vector<128x128xf32>
      %c0_11 = arith.constant 0 : index
      %c0_12 = arith.constant 0 : index
      %14 = vector.load %arg6[%c0_11, %c0_12] : memref<128x128xf32, #tpu.memory_space<vmem>>, vector<128x128xf32>
      tpu.vector_store %arg6[%c0_11, %c0_12], %13 {strides = array<i32>} : memref<128x128xf32, #tpu.memory_space<vmem>>, vector<128x128xf32>,
    } else {
    }
    %c0 = arith.constant 0 : index
    %c0_1 = arith.constant 0 : index
    %3 = vector.load %arg6[%c0, %c0_1] : memref<128x128xf32, #tpu.memory_space<vmem>>, vector<128x128xf32>
    %c0_2 = arith.constant 0 : index
    %c0_3 = arith.constant 0 : index
    %4 = vector.load %arg3[%c0_2, %c0_3] : memref<128x128xbf16, #tpu.memory_space<vmem>>, vector<128x128xbf16>
    %5 = arith.extf %4 : vector<128x128xbf16> to vector<128x128xf32>
    %c0_4 = arith.constant 0 : index
    %c0_5 = arith.constant 0 : index
    %6 = vector.load %arg4[%c0_4, %c0_5] : memref<128x128xf32, #tpu.memory_space<vmem>>, vector<128x128xf32>
    %cst = arith.constant dense<0.000000e+00> : vector<128x128xf32>
    %7 = tpu.matmul %5, %6, %cst {dimension_numbers = #tpu.dot_dimension_numbers<[1], [0], [0], [1], [0, 0, 1, 1], [], []>} : vector<128x128xf32>, vector<128x128xf32>, vector<128x128xf32> -> vector<128x128xf32>
    %8 = arith.addf %3, %7 : vector<128x128xf32>
    %c0_6 = arith.constant 0 : index
    %c0_7 = arith.constant 0 : index
    %9 = vector.load %arg6[%c0_6, %c0_7] : memref<128x128xf32, #tpu.memory_space<vmem>>, vector<128x128xf32>
    tpu.vector_store %arg6[%c0_6, %c0_7], %8 {strides = array<i32>} : memref<128x128xf32, #tpu.memory_space<vmem>>, vector<128x128xf32>,
    %c0_i32_8 = arith.constant 0 : i32
    %10 = arith.cmpi eq, %arg2, %c0_i32_8 : i32
    %11 = arith.extui %10 : i1 to i32
    %c0_i32_9 = arith.constant 0 : i32
    %12 = arith.cmpi ne, %11, %c0_i32_9 : i32
    scf.if %12 {
      %c0_10 = arith.constant 0 : index
      %c0_11 = arith.constant 0 : index
      %13 = vector.load %arg6[%c0_10, %c0_11] : memref<128x128xf32, #tpu.memory_space<vmem>>, vector<128x128xf32>
      %c0_12 = arith.constant 0 : index
      %c0_13 = arith.constant 0 : index
      %14 = vector.load %arg5[%c0_12, %c0_13] : memref<128x128xf32, #tpu.memory_space<vmem>>, vector<128x128xf32>
      tpu.vector_store %arg5[%c0_12, %c0_13], %13 {strides = array<i32>} : memref<128x128xf32, #tpu.memory_space<vmem>>, vector<128x128xf32>,
    } else {
    }
    return
  }
  func.func @transform_0(%arg0: i32, %arg1: i32, %arg2: i32) -> (i32, i32) {
    %c0_i32 = arith.constant 0 : i32
    return %arg0, %arg2 : i32, i32
  }
  func.func @transform_1(%arg0: i32, %arg1: i32, %arg2: i32) -> (i32, i32) {
    %c0_i32 = arith.constant 0 : i32
    return %arg2, %arg1 : i32, i32
  }
  func.func @transform_2(%arg0: i32, %arg1: i32, %arg2: i32) -> (i32, i32) {
    %c0_i32 = arith.constant 0 : i32
    return %arg0, %arg1 : i32, i32
  }
}

</mosaic_0001>

<llo_original>
// kernel: tpu_custom_call.1
$region0: #{tpu_custom_call.1}
  #allocation0 [shape = 'u32[]', space=smem, size = 0x4, offset = 0x4, fixed_abs, tag = 'smem constant byte address 0x4 - core index']
  #allocation1 [shape = 'u32[144,128]{1,0:T(1,128)}', space=vmem, size = 0x12000, scoped, tag = 'internal scratch']
  #allocation2 [shape = 'f32[128,128]{1,0:T(8,128)}', space=vmem, size = 0x10000, scoped, tag = 'scratch operand']
  %s0 = inlined_call_operand.hbm [shape: bf16[128,128], index: 0, kind: input, shape index: {}]
  %s1 = inlined_call_operand.hbm [shape: f32[128,128], index: 1, kind: input, shape index: {}]
  %s2 = inlined_call_operand.hbm [shape: f32[128,128], index: 2, kind: output, shape index: {}]
  %s3 = sld [smem:[#allocation0]]
  $region34: #{tpu_custom_call.1} parent=0
    _
  %s5 = ssub.s32 1, %s3
  %s6 = scalar_select 0, %s5, %s3
  $region1: #{tpu_custom_call.1} parent=0
    #allocation3 [shape = 'u8[32768]{0}', space=vmem, size = 0x8000, scoped, tag = 'input window, operand 0, single buffered']
    #allocation4 [shape = 's32[1]{0}', space=sflag, size = 0x4, scoped, tag = 'scoped memory for tpu_custom_call.1']
    #allocation5 [shape = 's32[1]{0}', space=sflag, size = 0x4, scoped, tag = 'scoped memory for tpu_custom_call.1']
    #allocation6 [shape = 'u8[65536]{0}', space=vmem, size = 0x10000, scoped, tag = 'input window, operand 1, single buffered']
    #allocation7 [shape = 's32[1]{0}', space=sflag, size = 0x4, scoped, tag = 'scoped memory for tpu_custom_call.1']
    #allocation8 [shape = 'u8[65536]{0}', space=vmem, size = 0x10000, scoped, tag = 'output window, operand 0, single buffered']
    %7 = vsyncpa [#allocation4], 0
    %8 = vsyncpa [#allocation7], 0
    %9 = vsyncpa [#allocation5], 0
    // Predicated region
    $region2: #{tpu_custom_call.1} parent=1 // pred_check
      _
    $region3: #{tpu_custom_call.1} parent=1 // pred_check_branch
      %11 = sbr.rel (0) target = $region5
    $region4: #{tpu_custom_call.1} parent=1 // pred_region
      %s13 = ssub.s32 1024, 1024
      %14 = vsyncadd [#allocation4], %s13
      %s15 = sshll.u32 [#allocation3], 4
      %s16 = int_to_ptr.vmem [resolvable:$true] %s15
      %21 = dma.hbm_to_vmem [thread:$0]  %s0, 1024, %s16, [#allocation4], 64, 64, 4
    $region5: #{tpu_custom_call.1} parent=1 // pred_fallthru
      _
    // Predicated region
    $region6: #{tpu_custom_call.1} parent=1 // pred_check
      _
    $region7: #{tpu_custom_call.1} parent=1 // pred_check_branch
      %23 = sbr.rel (0) target = $region9
    $region8: #{tpu_custom_call.1} parent=1 // pred_region
      %s25 = ssub.s32 2048, 2048
      %26 = vsyncadd [#allocation7], %s25
      %s27 = sshll.u32 [#allocation6], 4
      %s28 = int_to_ptr.vmem [resolvable:$true] %s27
      %33 = dma.hbm_to_vmem [thread:$0]  %s1, 2048, %s28, [#allocation7], 128, 128, 8
    $region9: #{tpu_custom_call.1} parent=1 // pred_fallthru
      _
    // Predicated region
    $region10: #{tpu_custom_call.1} parent=1 // pred_check
      _
    $region11: #{tpu_custom_call.1} parent=1 // pred_check_branch
      %35 = sbr.rel (0) target = $region13
    $region12: #{tpu_custom_call.1} parent=1 // pred_region
      %36 = dma.done [#allocation4], 1024
    $region13: #{tpu_custom_call.1} parent=1 // pred_fallthru
      _
    // Predicated region
    $region14: #{tpu_custom_call.1} parent=1 // pred_check
      _
    $region15: #{tpu_custom_call.1} parent=1 // pred_check_branch
      %38 = sbr.rel (0) target = $region17
    $region16: #{tpu_custom_call.1} parent=1 // pred_region
      %39 = dma.done [#allocation7], 2048
    $region17: #{tpu_custom_call.1} parent=1 // pred_fallthru
      _
    %p40 = scmp.eq.s32.totalorder 0, 0
    // Predicated region
    $region18: #{tpu_custom_call.1} parent=1 // pred_check
      %p41 = pneg %p40
    $region19: #{tpu_custom_call.1} parent=1 // pred_check_branch
      %43 = sbr.rel (%p41) target = $region21
    $region20: #{tpu_custom_call.1} parent=1 // pred_region
      %44 = vst [vmem:[#allocation2] sm:$0xff] 0.0
      %45 = vst [vmem:[#allocation2 + $0x8] sm:$0xff] 0.0
      %46 = vst [vmem:[#allocation2 + $0x10] sm:$0xff] 0.0
      %47 = vst [vmem:[#allocation2 + $0x18] sm:$0xff] 0.0
      %48 = vst [vmem:[#allocation2 + $0x20] sm:$0xff] 0.0
      %49 = vst [vmem:[#allocation2 + $0x28] sm:$0xff] 0.0
      %50 = vst [vmem:[#allocation2 + $0x30] sm:$0xff] 0.0
      %51 = vst [vmem:[#allocation2 + $0x38] sm:$0xff] 0.0
      %52 = vst [vmem:[#allocation2 + $0x40] sm:$0xff] 0.0
      %53 = vst [vmem:[#allocation2 + $0x48] sm:$0xff] 0.0
      %54 = vst [vmem:[#allocation2 + $0x50] sm:$0xff] 0.0
      %55 = vst [vmem:[#allocation2 + $0x58] sm:$0xff] 0.0
      %56 = vst [vmem:[#allocation2 + $0x60] sm:$0xff] 0.0
      %57 = vst [vmem:[#allocation2 + $0x68] sm:$0xff] 0.0
      %58 = vst [vmem:[#allocation2 + $0x70] sm:$0xff] 0.0
      %59 = vst [vmem:[#allocation2 + $0x78] sm:$0xff] 0.0
    $region21: #{tpu_custom_call.1} parent=1 // pred_fallthru
      _
    %v60 = vld [vmem:[#allocation2] sm:$0xff]
    %v61 = vld [vmem:[#allocation2 + $0x8] sm:$0xff]
    %v62 = vld [vmem:[#allocation2 + $0x10] sm:$0xff]
    %v63 = vld [vmem:[#allocation2 + $0x18] sm:$0xff]
    %v64 = vld [vmem:[#allocation2 + $0x20] sm:$0xff]
    %v65 = vld [vmem:[#allocation2 + $0x28] sm:$0xff]
    %v66 = vld [vmem:[#allocation2 + $0x30] sm:$0xff]
    %v67 = vld [vmem:[#allocation2 + $0x38] sm:$0xff]
    %v68 = vld [vmem:[#allocation2 + $0x40] sm:$0xff]
    %v69 = vld [vmem:[#allocation2 + $0x48] sm:$0xff]
    %v70 = vld [vmem:[#allocation2 + $0x50] sm:$0xff]
    %v71 = vld [vmem:[#allocation2 + $0x58] sm:$0xff]
    %v72 = vld [vmem:[#allocation2 + $0x60] sm:$0xff]
    %v73 = vld [vmem:[#allocation2 + $0x68] sm:$0xff]
    %v74 = vld [vmem:[#allocation2 + $0x70] sm:$0xff]
    %v75 = vld [vmem:[#allocation2 + $0x78] sm:$0xff]
    %v76 = vld [vmem:[#allocation3] sm:$0xf]
    %v77 = vld [vmem:[#allocation3 + $0x4] sm:$0xf]
    %v78 = vld [vmem:[#allocation3 + $0x8] sm:$0xf]
    %v79 = vld [vmem:[#allocation3 + $0xc] sm:$0xf]
    %v80 = vld [vmem:[#allocation3 + $0x10] sm:$0xf]
    %v81 = vld [vmem:[#allocation3 + $0x14] sm:$0xf]
    %v82 = vld [vmem:[#allocation3 + $0x18] sm:$0xf]
    %v83 = vld [vmem:[#allocation3 + $0x1c] sm:$0xf]
    %v84 = vld [vmem:[#allocation3 + $0x20] sm:$0xf]
    %v85 = vld [vmem:[#allocation3 + $0x24] sm:$0xf]
    %v86 = vld [vmem:[#allocation3 + $0x28] sm:$0xf]
    %v87 = vld [vmem:[#allocation3 + $0x2c] sm:$0xf]
    %v88 = vld [vmem:[#allocation3 + $0x30] sm:$0xf]
    %v89 = vld [vmem:[#allocation3 + $0x34] sm:$0xf]
    %v90 = vld [vmem:[#allocation3 + $0x38] sm:$0xf]
    %v91 = vld [vmem:[#allocation3 + $0x3c] sm:$0xf]
    %v92 = vunpack.c.l.bf16 %v76
    %v93 = vunpack.c.l.bf16 %v77
    %v94 = vunpack.c.l.bf16 %v78
    %v95 = vunpack.c.l.bf16 %v79
    %v96 = vunpack.c.l.bf16 %v80
    %v97 = vunpack.c.l.bf16 %v81
    %v98 = vunpack.c.l.bf16 %v82
    %v99 = vunpack.c.l.bf16 %v83
    %v100 = vunpack.c.l.bf16 %v84
    %v101 = vunpack.c.l.bf16 %v85
    %v102 = vunpack.c.l.bf16 %v86
    %v103 = vunpack.c.l.bf16 %v87
    %v104 = vunpack.c.l.bf16 %v88
    %v105 = vunpack.c.l.bf16 %v89
    %v106 = vunpack.c.l.bf16 %v90
    %v107 = vunpack.c.l.bf16 %v91
    %v108 = vld [vmem:[#allocation6] sm:$0xff]
    %v109 = vld [vmem:[#allocation6 + $0x8] sm:$0xff]
    %v110 = vld [vmem:[#allocation6 + $0x10] sm:$0xff]
    %v111 = vld [vmem:[#allocation6 + $0x18] sm:$0xff]
    %v112 = vld [vmem:[#allocation6 + $0x20] sm:$0xff]
    %v113 = vld [vmem:[#allocation6 + $0x28] sm:$0xff]
    %v114 = vld [vmem:[#allocation6 + $0x30] sm:$0xff]
    %v115 = vld [vmem:[#allocation6 + $0x38] sm:$0xff]
    %v116 = vld [vmem:[#allocation6 + $0x40] sm:$0xff]
    %v117 = vld [vmem:[#allocation6 + $0x48] sm:$0xff]
    %v118 = vld [vmem:[#allocation6 + $0x50] sm:$0xff]
    %v119 = vld [vmem:[#allocation6 + $0x58] sm:$0xff]
    %v120 = vld [vmem:[#allocation6 + $0x60] sm:$0xff]
    %v121 = vld [vmem:[#allocation6 + $0x68] sm:$0xff]
    %v122 = vld [vmem:[#allocation6 + $0x70] sm:$0xff]
    %v123 = vld [vmem:[#allocation6 + $0x78] sm:$0xff]
    %124 = vmatprep.subr.mxu0 0.0
    %125 = vmatpush1.msra.mxu0 %v108
    %126 = vmatprep.subr.mxu0 0.0
    %127 = vmatpush1.msra.mxu0 %v109
    %128 = vmatprep.subr.mxu0 0.0
    %129 = vmatpush1.msra.mxu0 %v110
    %130 = vmatprep.subr.mxu0 0.0
    %131 = vmatpush1.msra.mxu0 %v111
    %132 = vmatprep.subr.mxu0 0.0
    %133 = vmatpush1.msra.mxu0 %v112
    %134 = vmatprep.subr.mxu0 0.0
    %135 = vmatpush1.msra.mxu0 %v113
    %136 = vmatprep.subr.mxu0 0.0
    %137 = vmatpush1.msra.mxu0 %v114
    %138 = vmatprep.subr.mxu0 0.0
    %139 = vmatpush1.msra.mxu0 %v115
    %140 = vmatprep.subr.mxu0 0.0
    %141 = vmatpush1.msra.mxu0 %v116
    %142 = vmatprep.subr.mxu0 0.0
    %143 = vmatpush1.msra.mxu0 %v117
    %144 = vmatprep.subr.mxu0 0.0
    %145 = vmatpush1.msra.mxu0 %v118
    %146 = vmatprep.subr.mxu0 0.0
    %147 = vmatpush1.msra.mxu0 %v119
    %148 = vmatprep.subr.mxu0 0.0
    %149 = vmatpush1.msra.mxu0 %v120
    %150 = vmatprep.subr.mxu0 0.0
    %151 = vmatpush1.msra.mxu0 %v121
    %152 = vmatprep.subr.mxu0 0.0
    %153 = vmatpush1.msra.mxu0 %v122
    %154 = vmatprep.subr.mxu0 0.0
    %155 = vmatpush1.msra.mxu0 %v123
    %156 = vmatprep.subr.mxu0 0.0
    %157 = vmatpush1.msra.mxu0 0.0
    %158 = vmatprep.subr.mxu0 0.0
    %159 = vmatpush1.msra.mxu0 0.0
    %160 = vmatprep.subr.mxu0 0.0
    %161 = vmatpush1.msra.mxu0 0.0
    %162 = vmatprep.subr.mxu0 0.0
    %163 = vmatpush1.msra.mxu0 0.0
    %164 = vmatprep.subr.mxu0 0.0
    %165 = vmatpush1.msra.mxu0 0.0
    %166 = vmatprep.subr.mxu0 0.0
    %167 = vmatpush1.msra.mxu0 0.0
    %168 = vmatprep.subr.mxu0 0.0
    %169 = vmatpush1.msra.mxu0 0.0
    %170 = vmatprep.subr.mxu0 0.0
    %171 = vmatpush1.msra.mxu0 0.0
    %172 = vmatprep.subr.mxu0 0.0
    %173 = vmatpush1.msra.mxu0 0.0
    %174 = vmatprep.subr.mxu0 0.0
    %175 = vmatpush1.msra.mxu0 0.0
    %176 = vmatprep.subr.mxu0 0.0
    %177 = vmatpush1.msra.mxu0 0.0
    %178 = vmatprep.subr.mxu0 0.0
    %179 = vmatpush1.msra.mxu0 0.0
    %180 = vmatprep.subr.mxu0 0.0
    %181 = vmatpush1.msra.mxu0 0.0
    %182 = vmatprep.subr.mxu0 0.0
    %183 = vmatpush1.msra.mxu0 0.0
    %184 = vmatprep.subr.mxu0 0.0
    %185 = vmatpush1.msra.mxu0 0.0
    %186 = vmatprep.subr.mxu0 0.0
    %187 = vmatpush1.msra.mxu0 0.0
    %188 = vmatprep.mubr.f32.mxu0 0.0
    %189 = vmatmul.mubr.f32.gmra.mrb[0].mxu0 %v92
    %v190 = vpop.f32.mrb[0].mxu0
    %v191 = vadd.f32 0.0, %v190
    %v192 = vpop.f32.mrb[0].mxu0
    %193 = vmatprep.mubr.f32.mxu0 0.0
    %194 = vmatmul.mubr.f32.gmra.mrb[0].mxu0 %v93
    %v195 = vpop.f32.mrb[0].mxu0
    %v196 = vadd.f32 0.0, %v195
    %v197 = vpop.f32.mrb[0].mxu0
    %198 = vmatprep.mubr.f32.mxu0 0.0
    %199 = vmatmul.mubr.f32.gmra.mrb[0].mxu0 %v94
    %v200 = vpop.f32.mrb[0].mxu0
    %v201 = vadd.f32 0.0, %v200
    %v202 = vpop.f32.mrb[0].mxu0
    %203 = vmatprep.mubr.f32.mxu0 0.0
    %204 = vmatmul.mubr.f32.gmra.mrb[0].mxu0 %v95
    %v205 = vpop.f32.mrb[0].mxu0
    %v206 = vadd.f32 0.0, %v205
    %v207 = vpop.f32.mrb[0].mxu0
    %208 = vmatprep.mubr.f32.mxu0 0.0
    %209 = vmatmul.mubr.f32.gmra.mrb[0].mxu0 %v96
    %v210 = vpop.f32.mrb[0].mxu0
    %v211 = vadd.f32 0.0, %v210
    %v212 = vpop.f32.mrb[0].mxu0
    %213 = vmatprep.mubr.f32.mxu0 0.0
    %214 = vmatmul.mubr.f32.gmra.mrb[0].mxu0 %v97
    %v215 = vpop.f32.mrb[0].mxu0
    %v216 = vadd.f32 0.0, %v215
    %v217 = vpop.f32.mrb[0].mxu0
    %218 = vmatprep.mubr.f32.mxu0 0.0
    %219 = vmatmul.mubr.f32.gmra.mrb[0].mxu0 %v98
    %v220 = vpop.f32.mrb[0].mxu0
    %v221 = vadd.f32 0.0, %v220
    %v222 = vpop.f32.mrb[0].mxu0
    %223 = vmatprep.mubr.f32.mxu0 0.0
    %224 = vmatmul.mubr.f32.gmra.mrb[0].mxu0 %v99
    %v225 = vpop.f32.mrb[0].mxu0
    %v226 = vadd.f32 0.0, %v225
    %v227 = vpop.f32.mrb[0].mxu0
    %228 = vmatprep.mubr.f32.mxu0 0.0
    %229 = vmatmul.mubr.f32.gmra.mrb[0].mxu0 %v100
    %v230 = vpop.f32.mrb[0].mxu0
    %v231 = vadd.f32 0.0, %v230
    %v232 = vpop.f32.mrb[0].mxu0
    %233 = vmatprep.mubr.f32.mxu0 0.0
    %234 = vmatmul.mubr.f32.gmra.mrb[0].mxu0 %v101
    %v235 = vpop.f32.mrb[0].mxu0
    %v236 = vadd.f32 0.0, %v235
    %v237 = vpop.f32.mrb[0].mxu0
    %238 = vmatprep.mubr.f32.mxu0 0.0
    %239 = vmatmul.mubr.f32.gmra.mrb[0].mxu0 %v102
    %v240 = vpop.f32.mrb[0].mxu0
    %v241 = vadd.f32 0.0, %v240
    %v242 = vpop.f32.mrb[0].mxu0
    %243 = vmatprep.mubr.f32.mxu0 0.0
    %244 = vmatmul.mubr.f32.gmra.mrb[0].mxu0 %v103
    %v245 = vpop.f32.mrb[0].mxu0
    %v246 = vadd.f32 0.0, %v245
    %v247 = vpop.f32.mrb[0].mxu0
    %248 = vmatprep.mubr.f32.mxu0 0.0
    %249 = vmatmul.mubr.f32.gmra.mrb[0].mxu0 %v104
    %v250 = vpop.f32.mrb[0].mxu0
    %v251 = vadd.f32 0.0, %v250
    %v252 = vpop.f32.mrb[0].mxu0
    %253 = vmatprep.mubr.f32.mxu0 0.0
    %254 = vmatmul.mubr.f32.gmra.mrb[0].mxu0 %v105
    %v255 = vpop.f32.mrb[0].mxu0
    %v256 = vadd.f32 0.0, %v255
    %v257 = vpop.f32.mrb[0].mxu0
    %258 = vmatprep.mubr.f32.mxu0 0.0
    %259 = vmatmul.mubr.f32.gmra.mrb[0].mxu0 %v106
    %v260 = vpop.f32.mrb[0].mxu0
    %v261 = vadd.f32 0.0, %v260
    %v262 = vpop.f32.mrb[0].mxu0
    %263 = vmatprep.mubr.f32.mxu0 0.0
    %264 = vmatmul.mubr.f32.gmra.mrb[0].mxu0 %v107
    %v265 = vpop.f32.mrb[0].mxu0
    %v266 = vadd.f32 0.0, %v265
    %v267 = vpop.f32.mrb[0].mxu0
    %268 = vdwg.mxu0
    %v269 = vadd.f32 %v60, %v191
    %v270 = vadd.f32 %v61, %v196
    %v271 = vadd.f32 %v62, %v201
    %v272 = vadd.f32 %v63, %v206
    %v273 = vadd.f32 %v64, %v211
    %v274 = vadd.f32 %v65, %v216
    %v275 = vadd.f32 %v66, %v221
    %v276 = vadd.f32 %v67, %v226
    %v277 = vadd.f32 %v68, %v231
    %v278 = vadd.f32 %v69, %v236
    %v279 = vadd.f32 %v70, %v241
    %v280 = vadd.f32 %v71, %v246
    %v281 = vadd.f32 %v72, %v251
    %v282 = vadd.f32 %v73, %v256
    %v283 = vadd.f32 %v74, %v261
    %v284 = vadd.f32 %v75, %v266
    %285 = vst [vmem:[#allocation2] sm:$0xff] %v269
    %286 = vst [vmem:[#allocation2 + $0x8] sm:$0xff] %v270
    %287 = vst [vmem:[#allocation2 + $0x10] sm:$0xff] %v271
    %288 = vst [vmem:[#allocation2 + $0x18] sm:$0xff] %v272
    %289 = vst [vmem:[#allocation2 + $0x20] sm:$0xff] %v273
    %290 = vst [vmem:[#allocation2 + $0x28] sm:$0xff] %v274
    %291 = vst [vmem:[#allocation2 + $0x30] sm:$0xff] %v275
    %292 = vst [vmem:[#allocation2 + $0x38] sm:$0xff] %v276
    %293 = vst [vmem:[#allocation2 + $0x40] sm:$0xff] %v277
    %294 = vst [vmem:[#allocation2 + $0x48] sm:$0xff] %v278
    %295 = vst [vmem:[#allocation2 + $0x50] sm:$0xff] %v279
    %296 = vst [vmem:[#allocation2 + $0x58] sm:$0xff] %v280
    %297 = vst [vmem:[#allocation2 + $0x60] sm:$0xff] %v281
    %298 = vst [vmem:[#allocation2 + $0x68] sm:$0xff] %v282
    %299 = vst [vmem:[#allocation2 + $0x70] sm:$0xff] %v283
    %300 = vst [vmem:[#allocation2 + $0x78] sm:$0xff] %v284
    // Predicated region
    $region22: #{tpu_custom_call.1} parent=1 // pred_check
      %p301 = pneg %p40
    $region23: #{tpu_custom_call.1} parent=1 // pred_check_branch
      %303 = sbr.rel (%p301) target = $region25
    $region24: #{tpu_custom_call.1} parent=1 // pred_region
      %v304 = vld [vmem:[#allocation2] sm:$0xff]
      %v305 = vld [vmem:[#allocation2 + $0x8] sm:$0xff]
      %v306 = vld [vmem:[#allocation2 + $0x10] sm:$0xff]
      %v307 = vld [vmem:[#allocation2 + $0x18] sm:$0xff]
      %v308 = vld [vmem:[#allocation2 + $0x20] sm:$0xff]
      %v309 = vld [vmem:[#allocation2 + $0x28] sm:$0xff]
      %v310 = vld [vmem:[#allocation2 + $0x30] sm:$0xff]
      %v311 = vld [vmem:[#allocation2 + $0x38] sm:$0xff]
      %v312 = vld [vmem:[#allocation2 + $0x40] sm:$0xff]
      %v313 = vld [vmem:[#allocation2 + $0x48] sm:$0xff]
      %v314 = vld [vmem:[#allocation2 + $0x50] sm:$0xff]
      %v315 = vld [vmem:[#allocation2 + $0x58] sm:$0xff]
      %v316 = vld [vmem:[#allocation2 + $0x60] sm:$0xff]
      %v317 = vld [vmem:[#allocation2 + $0x68] sm:$0xff]
      %v318 = vld [vmem:[#allocation2 + $0x70] sm:$0xff]
      %v319 = vld [vmem:[#allocation2 + $0x78] sm:$0xff]
      %320 = vst [vmem:[#allocation8] sm:$0xff] %v304
      %321 = vst [vmem:[#allocation8 + $0x8] sm:$0xff] %v305
      %322 = vst [vmem:[#allocation8 + $0x10] sm:$0xff] %v306
      %323 = vst [vmem:[#allocation8 + $0x18] sm:$0xff] %v307
      %324 = vst [vmem:[#allocation8 + $0x20] sm:$0xff] %v308
      %325 = vst [vmem:[#allocation8 + $0x28] sm:$0xff] %v309
      %326 = vst [vmem:[#allocation8 + $0x30] sm:$0xff] %v310
      %327 = vst [vmem:[#allocation8 + $0x38] sm:$0xff] %v311
      %328 = vst [vmem:[#allocation8 + $0x40] sm:$0xff] %v312
      %329 = vst [vmem:[#allocation8 + $0x48] sm:$0xff] %v313
      %330 = vst [vmem:[#allocation8 + $0x50] sm:$0xff] %v314
      %331 = vst [vmem:[#allocation8 + $0x58] sm:$0xff] %v315
      %332 = vst [vmem:[#allocation8 + $0x60] sm:$0xff] %v316
      %333 = vst [vmem:[#allocation8 + $0x68] sm:$0xff] %v317
      %334 = vst [vmem:[#allocation8 + $0x70] sm:$0xff] %v318
      %335 = vst [vmem:[#allocation8 + $0x78] sm:$0xff] %v319
    $region25: #{tpu_custom_call.1} parent=1 // pred_fallthru
      _
    // Predicated region
    $region26: #{tpu_custom_call.1} parent=1 // pred_check
      _
    $region27: #{tpu_custom_call.1} parent=1 // pred_check_branch
      %337 = sbr.rel (0) target = $region29
    $region28: #{tpu_custom_call.1} parent=1 // pred_region
      %s339 = ssub.s32 2048, 2048
      %340 = vsyncadd [#allocation5], %s339
      %s341 = sshll.u32 [#allocation8], 4
      %s342 = int_to_ptr.vmem [resolvable:$true] %s341
      %347 = dma.vmem_to_hbm [thread:$0]  %s342, 2048, %s2, [#allocation5], 128, 128, 8
    $region29: #{tpu_custom_call.1} parent=1 // pred_fallthru
      _
    // Predicated region
    $region30: #{tpu_custom_call.1} parent=1 // pred_check
      _
    $region31: #{tpu_custom_call.1} parent=1 // pred_check_branch
      %349 = sbr.rel (0) target = $region33
    $region32: #{tpu_custom_call.1} parent=1 // pred_region
      %350 = dma.done [#allocation5], 2048
    $region33: #{tpu_custom_call.1} parent=1 // pred_fallthru
      _
    %351 = vsyncpa [#allocation4], 1
    %352 = vsyncpa [#allocation7], 1
    %353 = vsyncpa [#allocation5], 1

</llo_original>
